<compile_context>
chip_gen: v7x
topology: tpu7x:2x2x1
jax: 0.10.0
libtpu: 0.0.40
codegen_flags: <defaults>
</compile_context>

<pallas_src>
from functools import partial

import jax
import jax.numpy as jnp
from jax.experimental import pallas as pl
from jax.experimental.pallas import tpu as pltpu


def _sigmoid(z):
    # Explicit formulation (exp -> EUP, add/div -> VPU); used identically in kernel & reference.
    return 1.0 / (1.0 + jnp.exp(-z))


def _round_up(x, m):
    return (x + m - 1) // m * m


def highway_kernel(x_ref, w1_ref, b1_ref, w2_ref, b2_ref, out_ref, *, layers_num):
    """One batch-tile of the full highway stack, entirely in VMEM."""
    x = x_ref[...]          # [tb, Dp]
    w1 = w1_ref[...]        # [Dp, Dp]  (pre-transposed: y = x @ w1 + b1)
    b1 = b1_ref[...]        # [1, Dp]
    w2 = w2_ref[...]        # [Dp, Dp]
    b2 = b2_ref[...]        # [1, Dp]

    # layers_num is small -> static unroll; the SAME fc_1/fc_2 weights are reused each
    # iteration, exactly like the PyTorch module.
    for _ in range(layers_num):
        t = _sigmoid(jnp.dot(x, w1, preferred_element_type=jnp.float32) + b1)
        h = jnp.maximum(jnp.dot(x, w2, preferred_element_type=jnp.float32) + b2, 0.0)
        x = x + t * (h - x)          # == t * h + (1 - t) * x

    out_ref[...] = x.astype(out_ref.dtype)


def highway_forward(x, fc1_w_t, fc1_b, fc2_w_t, fc2_b, *, layers_num, block_rows=256):
    """
    x:       [B, D] f32
    fc1_w_t: [D, D] f32   (nn.Linear weight already transposed: y = x @ W^T + b)
    fc1_b:   [D]    f32
    fc2_w_t: [D, D] f32
    fc2_b:   [D]    f32
    returns  [B, D] f32
    """
    B, D = x.shape
    Dp = _round_up(D, 128)                     # lane-dense features / output stores
    tb = min(_round_up(B, 8), _round_up(block_rows, 8))
    Bp = _round_up(_round_up(B, 8), tb)        # batch padded to a whole number of tiles

    def pad2(a, rows, cols):
        return jnp.pad(a, ((0, rows - a.shape[0]), (0, cols - a.shape[1])))

    f32 = jnp.float32
    xp = pad2(x.astype(f32), Bp, Dp)
    w1p = pad2(fc1_w_t.astype(f32), Dp, Dp)
    w2p = pad2(fc2_w_t.astype(f32), Dp, Dp)
    b1p = pad2(fc1_b.reshape(1, D).astype(f32), 1, Dp)
    b2p = pad2(fc2_b.reshape(1, D).astype(f32), 1, Dp)

    grid = (Bp // tb,)
    kernel = partial(highway_kernel, layers_num=layers_num)

    out = pl.pallas_call(
        kernel,
        out_shape=jax.ShapeDtypeStruct((Bp, Dp), f32),
        grid=grid,
        in_specs=[
            pl.BlockSpec((tb, Dp), lambda i: (i, 0)),   # x: tiled over batch
            pl.BlockSpec((Dp, Dp), lambda i: (0, 0)),   # fc_1 weight: resident
            pl.BlockSpec((1, Dp), lambda i: (0, 0)),    # fc_1 bias:   resident
            pl.BlockSpec((Dp, Dp), lambda i: (0, 0)),   # fc_2 weight: resident
            pl.BlockSpec((1, Dp), lambda i: (0, 0)),    # fc_2 bias:   resident
        ],
        out_specs=pl.BlockSpec((tb, Dp), lambda i: (i, 0)),
        compiler_params=pltpu.CompilerParams(
            dimension_semantics=("parallel",),          # batch axis -> both TCs on v7x
        ),
    )(xp, w1p, b1p, w2p, b2p)

    return out[:B, :D]


def _reference_forward(x, fc1_w_t, fc1_b, fc2_w_t, fc2_b, layers_num):
    """Pure-JAX reference mirroring the PyTorch HighwayLayer."""
    v = x.astype(jnp.float32)
    for _ in range(layers_num):
        t = _sigmoid(v @ fc1_w_t + fc1_b)
        h = jnp.maximum(v @ fc2_w_t + fc2_b, 0.0)
        v = t * h + (1.0 - t) * v
    return v


if __name__ == "__main__":
    # Small, deterministic configuration consistent with the module.
    BATCH = 16          # batch_size
    OUT_DIM = 64        # fc_hidden_dim
    LAYERS = 3          # highway_layers_num

    key = jax.random.PRNGKey(0)
    kx, kw1, kb1, kw2, kb2 = jax.random.split(key, 5)
    bound = 1.0 / (OUT_DIM ** 0.5)

    x = jax.random.normal(kx, (BATCH, OUT_DIM), dtype=jnp.float32)
    fc1_w_t = jax.random.uniform(kw1, (OUT_DIM, OUT_DIM), jnp.float32, -bound, bound)
    fc1_b = jax.random.uniform(kb1, (OUT_DIM,), jnp.float32, -bound, bound)
    fc2_w_t = jax.random.uniform(kw2, (OUT_DIM, OUT_DIM), jnp.float32, -bound, bound)
    fc2_b = jax.random.uniform(kb2, (OUT_DIM,), jnp.float32, -bound, bound)

    out = jax.block_until_ready(
        highway_forward(x, fc1_w_t, fc1_b, fc2_w_t, fc2_b, layers_num=LAYERS)
    )

    ref = _reference_forward(x, fc1_w_t, fc1_b, fc2_w_t, fc2_b, LAYERS)
    assert out.shape == (BATCH, OUT_DIM)
    assert jnp.allclose(out, ref, rtol=1e-4, atol=1e-4)

    print("KERNEL_OK")
</pallas_src>

<mosaic_0001>
module attributes {stable_mosaic.version = 11 : i64} {
  func.func @highway_kernel(%arg0: i32, %arg1: memref<16x128xf32, #tpu.memory_space<vmem>>, %arg2: memref<128x128xf32, #tpu.memory_space<vmem>>, %arg3: memref<1x128xf32, #tpu.memory_space<vmem>>, %arg4: memref<128x128xf32, #tpu.memory_space<vmem>>, %arg5: memref<1x128xf32, #tpu.memory_space<vmem>>, %arg6: memref<16x128xf32, #tpu.memory_space<vmem>>) attributes {dimension_semantics = [#tpu.dimension_semantics<parallel>], iteration_bounds = array<i64: 1>, scalar_prefetch = 0 : i64, scratch_operands = 0 : i64, tpu.core_type = #tpu.core_type<tc>, window_params = [{transform_indices = @transform_0, window_bounds = array<i64: 16, 128>}, {pipeline_mode = #tpu.pipeline_mode<synchronous>, transform_indices = @transform_1, window_bounds = array<i64: 128, 128>}, {pipeline_mode = #tpu.pipeline_mode<synchronous>, transform_indices = @transform_2, window_bounds = array<i64: 1, 128>}, {pipeline_mode = #tpu.pipeline_mode<synchronous>, transform_indices = @transform_3, window_bounds = array<i64: 128, 128>}, {pipeline_mode = #tpu.pipeline_mode<synchronous>, transform_indices = @transform_4, window_bounds = array<i64: 1, 128>}, {transform_indices = @transform_5, window_bounds = array<i64: 16, 128>}]} {
    %c0 = arith.constant 0 : index
    %c0_0 = arith.constant 0 : index
    %0 = vector.load %arg1[%c0, %c0_0] : memref<16x128xf32, #tpu.memory_space<vmem>>, vector<16x128xf32>
    %c0_1 = arith.constant 0 : index
    %c0_2 = arith.constant 0 : index
    %1 = vector.load %arg2[%c0_1, %c0_2] : memref<128x128xf32, #tpu.memory_space<vmem>>, vector<128x128xf32>
    %c0_3 = arith.constant 0 : index
    %c0_4 = arith.constant 0 : index
    %2 = vector.load %arg3[%c0_3, %c0_4] : memref<1x128xf32, #tpu.memory_space<vmem>>, vector<1x128xf32>
    %c0_5 = arith.constant 0 : index
    %c0_6 = arith.constant 0 : index
    %3 = vector.load %arg4[%c0_5, %c0_6] : memref<128x128xf32, #tpu.memory_space<vmem>>, vector<128x128xf32>
    %c0_7 = arith.constant 0 : index
    %c0_8 = arith.constant 0 : index
    %4 = vector.load %arg5[%c0_7, %c0_8] : memref<1x128xf32, #tpu.memory_space<vmem>>, vector<1x128xf32>
    %cst = arith.constant dense<0.000000e+00> : vector<16x128xf32>
    %5 = tpu.matmul %0, %1, %cst {dimension_numbers = #tpu.dot_dimension_numbers<[1], [0], [0], [1], [0, 0, 1, 1], [], []>} : vector<16x128xf32>, vector<128x128xf32>, vector<16x128xf32> -> vector<16x128xf32>
    %6 = vector.broadcast %2 : vector<1x128xf32> to vector<16x128xf32>
    %7 = arith.addf %5, %6 : vector<16x128xf32>
    %cst_9 = arith.constant 0.000000e+00 : f32
    %8 = vector.broadcast %cst_9 : f32 to vector<16x128xf32>
    %9 = arith.subf %8, %7 : vector<16x128xf32>
    %10 = math.exp %9 : vector<16x128xf32>
    %cst_10 = arith.constant 1.000000e+00 : f32
    %11 = vector.broadcast %cst_10 : f32 to vector<16x128xf32>
    %12 = arith.addf %11, %10 : vector<16x128xf32>
    %cst_11 = arith.constant 1.000000e+00 : f32
    %13 = vector.broadcast %cst_11 : f32 to vector<16x128xf32>
    %14 = arith.divf %13, %12 : vector<16x128xf32>
    %cst_12 = arith.constant dense<0.000000e+00> : vector<16x128xf32>
    %15 = tpu.matmul %0, %3, %cst_12 {dimension_numbers = #tpu.dot_dimension_numbers<[1], [0], [0], [1], [0, 0, 1, 1], [], []>} : vector<16x128xf32>, vector<128x128xf32>, vector<16x128xf32> -> vector<16x128xf32>
    %16 = vector.broadcast %4 : vector<1x128xf32> to vector<16x128xf32>
    %17 = arith.addf %15, %16 : vector<16x128xf32>
    %cst_13 = arith.constant 0.000000e+00 : f32
    %18 = vector.broadcast %cst_13 : f32 to vector<16x128xf32>
    %19 = arith.maximumf %17, %18 : vector<16x128xf32>
    %20 = arith.subf %19, %0 : vector<16x128xf32>
    %21 = arith.mulf %14, %20 : vector<16x128xf32>
    %22 = arith.addf %0, %21 : vector<16x128xf32>
    %cst_14 = arith.constant dense<0.000000e+00> : vector<16x128xf32>
    %23 = tpu.matmul %22, %1, %cst_14 {dimension_numbers = #tpu.dot_dimension_numbers<[1], [0], [0], [1], [0, 0, 1, 1], [], []>} : vector<16x128xf32>, vector<128x128xf32>, vector<16x128xf32> -> vector<16x128xf32>
    %24 = vector.broadcast %2 : vector<1x128xf32> to vector<16x128xf32>
    %25 = arith.addf %23, %24 : vector<16x128xf32>
    %cst_15 = arith.constant 0.000000e+00 : f32
    %26 = vector.broadcast %cst_15 : f32 to vector<16x128xf32>
    %27 = arith.subf %26, %25 : vector<16x128xf32>
    %28 = math.exp %27 : vector<16x128xf32>
    %cst_16 = arith.constant 1.000000e+00 : f32
    %29 = vector.broadcast %cst_16 : f32 to vector<16x128xf32>
    %30 = arith.addf %29, %28 : vector<16x128xf32>
    %cst_17 = arith.constant 1.000000e+00 : f32
    %31 = vector.broadcast %cst_17 : f32 to vector<16x128xf32>
    %32 = arith.divf %31, %30 : vector<16x128xf32>
    %cst_18 = arith.constant dense<0.000000e+00> : vector<16x128xf32>
    %33 = tpu.matmul %22, %3, %cst_18 {dimension_numbers = #tpu.dot_dimension_numbers<[1], [0], [0], [1], [0, 0, 1, 1], [], []>} : vector<16x128xf32>, vector<128x128xf32>, vector<16x128xf32> -> vector<16x128xf32>
    %34 = vector.broadcast %4 : vector<1x128xf32> to vector<16x128xf32>
    %35 = arith.addf %33, %34 : vector<16x128xf32>
    %cst_19 = arith.constant 0.000000e+00 : f32
    %36 = vector.broadcast %cst_19 : f32 to vector<16x128xf32>
    %37 = arith.maximumf %35, %36 : vector<16x128xf32>
    %38 = arith.subf %37, %22 : vector<16x128xf32>
    %39 = arith.mulf %32, %38 : vector<16x128xf32>
    %40 = arith.addf %22, %39 : vector<16x128xf32>
    %cst_20 = arith.constant dense<0.000000e+00> : vector<16x128xf32>
    %41 = tpu.matmul %40, %1, %cst_20 {dimension_numbers = #tpu.dot_dimension_numbers<[1], [0], [0], [1], [0, 0, 1, 1], [], []>} : vector<16x128xf32>, vector<128x128xf32>, vector<16x128xf32> -> vector<16x128xf32>
    %42 = vector.broadcast %2 : vector<1x128xf32> to vector<16x128xf32>
    %43 = arith.addf %41, %42 : vector<16x128xf32>
    %cst_21 = arith.constant 0.000000e+00 : f32
    %44 = vector.broadcast %cst_21 : f32 to vector<16x128xf32>
    %45 = arith.subf %44, %43 : vector<16x128xf32>
    %46 = math.exp %45 : vector<16x128xf32>
    %cst_22 = arith.constant 1.000000e+00 : f32
    %47 = vector.broadcast %cst_22 : f32 to vector<16x128xf32>
    %48 = arith.addf %47, %46 : vector<16x128xf32>
    %cst_23 = arith.constant 1.000000e+00 : f32
    %49 = vector.broadcast %cst_23 : f32 to vector<16x128xf32>
    %50 = arith.divf %49, %48 : vector<16x128xf32>
    %cst_24 = arith.constant dense<0.000000e+00> : vector<16x128xf32>
    %51 = tpu.matmul %40, %3, %cst_24 {dimension_numbers = #tpu.dot_dimension_numbers<[1], [0], [0], [1], [0, 0, 1, 1], [], []>} : vector<16x128xf32>, vector<128x128xf32>, vector<16x128xf32> -> vector<16x128xf32>
    %52 = vector.broadcast %4 : vector<1x128xf32> to vector<16x128xf32>
    %53 = arith.addf %51, %52 : vector<16x128xf32>
    %cst_25 = arith.constant 0.000000e+00 : f32
    %54 = vector.broadcast %cst_25 : f32 to vector<16x128xf32>
    %55 = arith.maximumf %53, %54 : vector<16x128xf32>
    %56 = arith.subf %55, %40 : vector<16x128xf32>
    %57 = arith.mulf %50, %56 : vector<16x128xf32>
    %58 = arith.addf %40, %57 : vector<16x128xf32>
    %c0_26 = arith.constant 0 : index
    %c0_27 = arith.constant 0 : index
    %59 = vector.load %arg6[%c0_26, %c0_27] : memref<16x128xf32, #tpu.memory_space<vmem>>, vector<16x128xf32>
    tpu.vector_store %arg6[%c0_26, %c0_27], %58 {strides = array<i32>} : memref<16x128xf32, #tpu.memory_space<vmem>>, vector<16x128xf32>,
    return
  }
  func.func @transform_0(%arg0: i32) -> (i32, i32) {
    %c0_i32 = arith.constant 0 : i32
    %c0_i32_0 = arith.constant 0 : i32
    return %arg0, %c0_i32 : i32, i32
  }
  func.func @transform_1(%arg0: i32) -> (i32, i32) {
    %c0_i32 = arith.constant 0 : i32
    %c0_i32_0 = arith.constant 0 : i32
    %c0_i32_1 = arith.constant 0 : i32
    return %c0_i32, %c0_i32_0 : i32, i32
  }
  func.func @transform_2(%arg0: i32) -> (i32, i32) {
    %c0_i32 = arith.constant 0 : i32
    %c0_i32_0 = arith.constant 0 : i32
    %c0_i32_1 = arith.constant 0 : i32
    return %c0_i32, %c0_i32_0 : i32, i32
  }
  func.func @transform_3(%arg0: i32) -> (i32, i32) {
    %c0_i32 = arith.constant 0 : i32
    %c0_i32_0 = arith.constant 0 : i32
    %c0_i32_1 = arith.constant 0 : i32
    return %c0_i32, %c0_i32_0 : i32, i32
  }
  func.func @transform_4(%arg0: i32) -> (i32, i32) {
    %c0_i32 = arith.constant 0 : i32
    %c0_i32_0 = arith.constant 0 : i32
    %c0_i32_1 = arith.constant 0 : i32
    return %c0_i32, %c0_i32_0 : i32, i32
  }
  func.func @transform_5(%arg0: i32) -> (i32, i32) {
    %c0_i32 = arith.constant 0 : i32
    %c0_i32_0 = arith.constant 0 : i32
    return %arg0, %c0_i32 : i32, i32
  }
}

</mosaic_0001>

<llo_original>
// kernel: tpu_custom_call.1
$region0: #{tpu_custom_call.1}
  #allocation0 [shape = 'u32[]', space=smem, size = 0x4, offset = 0x4, fixed_abs, tag = 'smem constant byte address 0x4 - core index']
  #allocation1 [shape = 'u32[144,128]{1,0:T(1,128)}', space=vmem, size = 0x12000, scoped, tag = 'internal scratch']
  %s0 = inlined_call_operand.hbm [shape: f32[16,128], index: 0, kind: input, shape index: {}]
  %s1 = inlined_call_operand.hbm [shape: f32[128,128], index: 1, kind: input, shape index: {}]
  %s2 = inlined_call_operand.vmem [shape: f32[1,128], index: 2, kind: input, shape index: {}]
  %s3 = inlined_call_operand.hbm [shape: f32[128,128], index: 3, kind: input, shape index: {}]
  %s4 = inlined_call_operand.vmem [shape: f32[1,128], index: 4, kind: input, shape index: {}]
  %s5 = inlined_call_operand.hbm [shape: f32[16,128], index: 5, kind: output, shape index: {}]
  %s6 = sld [smem:[#allocation0]]
  $region42: #{tpu_custom_call.1} parent=0
    _
  %s8 = ssub.s32 1, %s6
  %s9 = scalar_select 0, %s8, %s6
  $region1: #{tpu_custom_call.1} parent=0
    #allocation2 [shape = 'u8[8192]{0}', space=vmem, size = 0x2000, scoped, tag = 'input window, operand 0, single buffered']
    #allocation3 [shape = 's32[1]{0}', space=sflag, size = 0x4, scoped, tag = 'scoped memory for tpu_custom_call.1']
    #allocation4 [shape = 's32[1]{0}', space=sflag, size = 0x4, scoped, tag = 'scoped memory for tpu_custom_call.1']
    #allocation5 [shape = 'u8[65536]{0}', space=vmem, size = 0x10000, scoped, tag = 'input window, operand 1, single buffered']
    #allocation6 [shape = 's32[1]{0}', space=sflag, size = 0x4, scoped, tag = 'scoped memory for tpu_custom_call.1']
    #allocation7 [shape = 'u8[65536]{0}', space=vmem, size = 0x10000, scoped, tag = 'input window, operand 3, single buffered']
    #allocation8 [shape = 'u8[8192]{0}', space=vmem, size = 0x2000, scoped, tag = 'output window, operand 0, single buffered']
    %10 = vsyncpa [#allocation3], 0
    %11 = vsyncpa [#allocation6], 0
    %12 = vsyncpa [#allocation4], 0
    // Predicated region
    $region2: #{tpu_custom_call.1} parent=1 // pred_check
      _
    $region3: #{tpu_custom_call.1} parent=1 // pred_check_branch
      %14 = sbr.rel (0) target = $region5
    $region4: #{tpu_custom_call.1} parent=1 // pred_region
      %s16 = ssub.s32 256, 256
      %17 = vsyncadd [#allocation3], %s16
      %s18 = sshll.u32 [#allocation2], 4
      %s19 = int_to_ptr.vmem [resolvable:$true] %s18
      %24 = dma.hbm_to_vmem [thread:$0]  %s0, 256, %s19, [#allocation3], 128, 128, 8
    $region5: #{tpu_custom_call.1} parent=1 // pred_fallthru
      _
    // Predicated region
    $region6: #{tpu_custom_call.1} parent=1 // pred_check
      _
    $region7: #{tpu_custom_call.1} parent=1 // pred_check_branch
      %26 = sbr.rel (0) target = $region9
    $region8: #{tpu_custom_call.1} parent=1 // pred_region
      %s28 = ssub.s32 2048, 2048
      %29 = vsyncadd [#allocation6], %s28
      %s30 = sshll.u32 [#allocation5], 4
      %s31 = int_to_ptr.vmem [resolvable:$true] %s30
      %36 = dma.hbm_to_vmem [thread:$0]  %s1, 2048, %s31, [#allocation6], 128, 128, 8
    $region9: #{tpu_custom_call.1} parent=1 // pred_fallthru
      _
    // Predicated region
    $region10: #{tpu_custom_call.1} parent=1 // pred_check
      _
    $region11: #{tpu_custom_call.1} parent=1 // pred_check_branch
      %38 = sbr.rel (0) target = $region13
    $region12: #{tpu_custom_call.1} parent=1 // pred_region
      _
    $region13: #{tpu_custom_call.1} parent=1 // pred_fallthru
      _
    // Predicated region
    $region14: #{tpu_custom_call.1} parent=1 // pred_check
      _
    $region15: #{tpu_custom_call.1} parent=1 // pred_check_branch
      %40 = sbr.rel (0) target = $region17
    $region16: #{tpu_custom_call.1} parent=1 // pred_region
      %s42 = ssub.s32 2048, 2048
      %43 = vsyncadd [#allocation6], %s42
      %s44 = sshll.u32 [#allocation7], 4
      %s45 = int_to_ptr.vmem [resolvable:$true] %s44
      %50 = dma.hbm_to_vmem [thread:$0]  %s3, 2048, %s45, [#allocation6], 128, 128, 8
    $region17: #{tpu_custom_call.1} parent=1 // pred_fallthru
      _
    // Predicated region
    $region18: #{tpu_custom_call.1} parent=1 // pred_check
      _
    $region19: #{tpu_custom_call.1} parent=1 // pred_check_branch
      %52 = sbr.rel (0) target = $region21
    $region20: #{tpu_custom_call.1} parent=1 // pred_region
      _
    $region21: #{tpu_custom_call.1} parent=1 // pred_fallthru
      _
    // Predicated region
    $region22: #{tpu_custom_call.1} parent=1 // pred_check
      _
    $region23: #{tpu_custom_call.1} parent=1 // pred_check_branch
      %54 = sbr.rel (0) target = $region25
    $region24: #{tpu_custom_call.1} parent=1 // pred_region
      %55 = dma.done [#allocation3], 256
    $region25: #{tpu_custom_call.1} parent=1 // pred_fallthru
      _
    // Predicated region
    $region26: #{tpu_custom_call.1} parent=1 // pred_check
      _
    $region27: #{tpu_custom_call.1} parent=1 // pred_check_branch
      %57 = sbr.rel (0) target = $region29
    $region28: #{tpu_custom_call.1} parent=1 // pred_region
      %58 = dma.done [#allocation6], 2048
    $region29: #{tpu_custom_call.1} parent=1 // pred_fallthru
      _
    // Predicated region
    $region30: #{tpu_custom_call.1} parent=1 // pred_check
      _
    $region31: #{tpu_custom_call.1} parent=1 // pred_check_branch
      %60 = sbr.rel (0) target = $region33
    $region32: #{tpu_custom_call.1} parent=1 // pred_region
      %61 = dma.done [#allocation6], 2048
    $region33: #{tpu_custom_call.1} parent=1 // pred_fallthru
      _
    %v62 = vld [vmem:[#allocation2] sm:$0xff]
    %v63 = vld [vmem:[#allocation2 + $0x8] sm:$0xff]
    %v64 = vld [vmem:[#allocation5] sm:$0xff]
    %v65 = vld [vmem:[#allocation5 + $0x8] sm:$0xff]
    %v66 = vld [vmem:[#allocation5 + $0x10] sm:$0xff]
    %v67 = vld [vmem:[#allocation5 + $0x18] sm:$0xff]
    %v68 = vld [vmem:[#allocation5 + $0x20] sm:$0xff]
    %v69 = vld [vmem:[#allocation5 + $0x28] sm:$0xff]
    %v70 = vld [vmem:[#allocation5 + $0x30] sm:$0xff]
    %v71 = vld [vmem:[#allocation5 + $0x38] sm:$0xff]
    %v72 = vld [vmem:[#allocation5 + $0x40] sm:$0xff]
    %v73 = vld [vmem:[#allocation5 + $0x48] sm:$0xff]
    %v74 = vld [vmem:[#allocation5 + $0x50] sm:$0xff]
    %v75 = vld [vmem:[#allocation5 + $0x58] sm:$0xff]
    %v76 = vld [vmem:[#allocation5 + $0x60] sm:$0xff]
    %v77 = vld [vmem:[#allocation5 + $0x68] sm:$0xff]
    %v78 = vld [vmem:[#allocation5 + $0x70] sm:$0xff]
    %v79 = vld [vmem:[#allocation5 + $0x78] sm:$0xff]
    %v80 = vld [vmem:[%s2] sm:$0x1]
    %v81 = vld [vmem:[#allocation7] sm:$0xff]
    %v82 = vld [vmem:[#allocation7 + $0x8] sm:$0xff]
    %v83 = vld [vmem:[#allocation7 + $0x10] sm:$0xff]
    %v84 = vld [vmem:[#allocation7 + $0x18] sm:$0xff]
    %v85 = vld [vmem:[#allocation7 + $0x20] sm:$0xff]
    %v86 = vld [vmem:[#allocation7 + $0x28] sm:$0xff]
    %v87 = vld [vmem:[#allocation7 + $0x30] sm:$0xff]
    %v88 = vld [vmem:[#allocation7 + $0x38] sm:$0xff]
    %v89 = vld [vmem:[#allocation7 + $0x40] sm:$0xff]
    %v90 = vld [vmem:[#allocation7 + $0x48] sm:$0xff]
    %v91 = vld [vmem:[#allocation7 + $0x50] sm:$0xff]
    %v92 = vld [vmem:[#allocation7 + $0x58] sm:$0xff]
    %v93 = vld [vmem:[#allocation7 + $0x60] sm:$0xff]
    %v94 = vld [vmem:[#allocation7 + $0x68] sm:$0xff]
    %v95 = vld [vmem:[#allocation7 + $0x70] sm:$0xff]
    %v96 = vld [vmem:[#allocation7 + $0x78] sm:$0xff]
    %v97 = vld [vmem:[%s4] sm:$0x1]
    %v99 = vlaneseq
    %v100 = vshrl.u32 %v99, 7
    %v101 = vsub.s32 0, %v100
    %v102 = vrot.slane %v80, %v101
    %104 = vmatprep.subr.mxu0 0.0
    %105 = vmatpush1.msra.mxu0 %v64
    %106 = vmatprep.subr.mxu0 0.0
    %107 = vmatpush1.msra.mxu0 %v65
    %108 = vmatprep.subr.mxu0 0.0
    %109 = vmatpush1.msra.mxu0 %v66
    %110 = vmatprep.subr.mxu0 0.0
    %111 = vmatpush1.msra.mxu0 %v67
    %112 = vmatprep.subr.mxu0 0.0
    %113 = vmatpush1.msra.mxu0 %v68
    %114 = vmatprep.subr.mxu0 0.0
    %115 = vmatpush1.msra.mxu0 %v69
    %116 = vmatprep.subr.mxu0 0.0
    %117 = vmatpush1.msra.mxu0 %v70
    %118 = vmatprep.subr.mxu0 0.0
    %119 = vmatpush1.msra.mxu0 %v71
    %120 = vmatprep.subr.mxu0 0.0
    %121 = vmatpush1.msra.mxu0 %v72
    %122 = vmatprep.subr.mxu0 0.0
    %123 = vmatpush1.msra.mxu0 %v73
    %124 = vmatprep.subr.mxu0 0.0
    %125 = vmatpush1.msra.mxu0 %v74
    %126 = vmatprep.subr.mxu0 0.0
    %127 = vmatpush1.msra.mxu0 %v75
    %128 = vmatprep.subr.mxu0 0.0
    %129 = vmatpush1.msra.mxu0 %v76
    %130 = vmatprep.subr.mxu0 0.0
    %131 = vmatpush1.msra.mxu0 %v77
    %132 = vmatprep.subr.mxu0 0.0
    %133 = vmatpush1.msra.mxu0 %v78
    %134 = vmatprep.subr.mxu0 0.0
    %135 = vmatpush1.msra.mxu0 %v79
    %136 = vmatprep.subr.mxu0 0.0
    %137 = vmatpush1.msra.mxu0 0.0
    %138 = vmatprep.subr.mxu0 0.0
    %139 = vmatpush1.msra.mxu0 0.0
    %140 = vmatprep.subr.mxu0 0.0
    %141 = vmatpush1.msra.mxu0 0.0
    %142 = vmatprep.subr.mxu0 0.0
    %143 = vmatpush1.msra.mxu0 0.0
    %144 = vmatprep.subr.mxu0 0.0
    %145 = vmatpush1.msra.mxu0 0.0
    %146 = vmatprep.subr.mxu0 0.0
    %147 = vmatpush1.msra.mxu0 0.0
    %148 = vmatprep.subr.mxu0 0.0
    %149 = vmatpush1.msra.mxu0 0.0
    %150 = vmatprep.subr.mxu0 0.0
    %151 = vmatpush1.msra.mxu0 0.0
    %152 = vmatprep.subr.mxu0 0.0
    %153 = vmatpush1.msra.mxu0 0.0
    %154 = vmatprep.subr.mxu0 0.0
    %155 = vmatpush1.msra.mxu0 0.0
    %156 = vmatprep.subr.mxu0 0.0
    %157 = vmatpush1.msra.mxu0 0.0
    %158 = vmatprep.subr.mxu0 0.0
    %159 = vmatpush1.msra.mxu0 0.0
    %160 = vmatprep.subr.mxu0 0.0
    %161 = vmatpush1.msra.mxu0 0.0
    %162 = vmatprep.subr.mxu0 0.0
    %163 = vmatpush1.msra.mxu0 0.0
    %164 = vmatprep.subr.mxu0 0.0
    %165 = vmatpush1.msra.mxu0 0.0
    %166 = vmatprep.subr.mxu0 0.0
    %167 = vmatpush1.msra.mxu0 0.0
    %168 = vmatprep.mubr.f32.mxu0 0.0
    %169 = vmatmul.mubr.f32.gmra.mrb[0].mxu0 %v62
    %v170 = vpop.f32.mrb[0].mxu0
    %v171 = vadd.f32 %v102, %v170
    %v172 = vpop.f32.mrb[0].mxu0
    %173 = vmatprep.mubr.f32.mxu0 0.0
    %174 = vmatmul.mubr.f32.gmra.mrb[0].mxu0 %v63
    %v175 = vpop.f32.mrb[0].mxu0
    %v176 = vadd.f32 %v102, %v175
    %v177 = vpop.f32.mrb[0].mxu0
    %178 = vdwg.mxu0
    %v179 = vsub.f32 0.0, %v171
    %v180 = vsub.f32 0.0, %v176
    %v181 = vmul.f32 %v179, 1.442695
    %v182 = vpow.pop %v181
    %v183 = vmul.f32 %v180, 1.442695
    %v184 = vpow.pop %v183
    %v185 = vadd.f32 %v182, 1.0
    %v186 = vadd.f32 %v184, 1.0
    %v187 = vrcp.pop %v185
    %v188 = vmul.f32 1.0, %v187
    %v189 = vrcp.pop %v186
    %v190 = vmul.f32 1.0, %v189
    %v192 = vlaneseq
    %v193 = vshrl.u32 %v192, 7
    %v194 = vsub.s32 0, %v193
    %v195 = vrot.slane %v97, %v194
    %197 = vmatprep.subr.mxu0 0.0
    %198 = vmatpush1.msra.mxu0 %v81
    %199 = vmatprep.subr.mxu0 0.0
    %200 = vmatpush1.msra.mxu0 %v82
    %201 = vmatprep.subr.mxu0 0.0
    %202 = vmatpush1.msra.mxu0 %v83
    %203 = vmatprep.subr.mxu0 0.0
    %204 = vmatpush1.msra.mxu0 %v84
    %205 = vmatprep.subr.mxu0 0.0
    %206 = vmatpush1.msra.mxu0 %v85
    %207 = vmatprep.subr.mxu0 0.0
    %208 = vmatpush1.msra.mxu0 %v86
    %209 = vmatprep.subr.mxu0 0.0
    %210 = vmatpush1.msra.mxu0 %v87
    %211 = vmatprep.subr.mxu0 0.0
    %212 = vmatpush1.msra.mxu0 %v88
    %213 = vmatprep.subr.mxu0 0.0
    %214 = vmatpush1.msra.mxu0 %v89
    %215 = vmatprep.subr.mxu0 0.0
    %216 = vmatpush1.msra.mxu0 %v90
    %217 = vmatprep.subr.mxu0 0.0
    %218 = vmatpush1.msra.mxu0 %v91
    %219 = vmatprep.subr.mxu0 0.0
    %220 = vmatpush1.msra.mxu0 %v92
    %221 = vmatprep.subr.mxu0 0.0
    %222 = vmatpush1.msra.mxu0 %v93
    %223 = vmatprep.subr.mxu0 0.0
    %224 = vmatpush1.msra.mxu0 %v94
    %225 = vmatprep.subr.mxu0 0.0
    %226 = vmatpush1.msra.mxu0 %v95
    %227 = vmatprep.subr.mxu0 0.0
    %228 = vmatpush1.msra.mxu0 %v96
    %229 = vmatprep.subr.mxu0 0.0
    %230 = vmatpush1.msra.mxu0 0.0
    %231 = vmatprep.subr.mxu0 0.0
    %232 = vmatpush1.msra.mxu0 0.0
    %233 = vmatprep.subr.mxu0 0.0
    %234 = vmatpush1.msra.mxu0 0.0
    %235 = vmatprep.subr.mxu0 0.0
    %236 = vmatpush1.msra.mxu0 0.0
    %237 = vmatprep.subr.mxu0 0.0
    %238 = vmatpush1.msra.mxu0 0.0
    %239 = vmatprep.subr.mxu0 0.0
    %240 = vmatpush1.msra.mxu0 0.0
    %241 = vmatprep.subr.mxu0 0.0
    %242 = vmatpush1.msra.mxu0 0.0
    %243 = vmatprep.subr.mxu0 0.0
    %244 = vmatpush1.msra.mxu0 0.0
    %245 = vmatprep.subr.mxu0 0.0
    %246 = vmatpush1.msra.mxu0 0.0
    %247 = vmatprep.subr.mxu0 0.0
    %248 = vmatpush1.msra.mxu0 0.0
    %249 = vmatprep.subr.mxu0 0.0
    %250 = vmatpush1.msra.mxu0 0.0
    %251 = vmatprep.subr.mxu0 0.0
    %252 = vmatpush1.msra.mxu0 0.0
    %253 = vmatprep.subr.mxu0 0.0
    %254 = vmatpush1.msra.mxu0 0.0
    %255 = vmatprep.subr.mxu0 0.0
    %256 = vmatpush1.msra.mxu0 0.0
    %257 = vmatprep.subr.mxu0 0.0
    %258 = vmatpush1.msra.mxu0 0.0
    %259 = vmatprep.subr.mxu0 0.0
    %260 = vmatpush1.msra.mxu0 0.0
    %261 = vmatprep.mubr.f32.mxu0 0.0
    %262 = vmatmul.mubr.f32.gmra.mrb[0].mxu0 %v62
    %v263 = vpop.f32.mrb[0].mxu0
    %v264 = vadd.f32 %v195, %v263
    %v265 = vpop.f32.mrb[0].mxu0
    %266 = vmatprep.mubr.f32.mxu0 0.0
    %267 = vmatmul.mubr.f32.gmra.mrb[0].mxu0 %v63
    %v268 = vpop.f32.mrb[0].mxu0
    %v269 = vadd.f32 %v195, %v268
    %v270 = vpop.f32.mrb[0].mxu0
    %271 = vdwg.mxu0
    %v272 = vmax.f32 %v264, 0.0
    %v273 = vmax.f32 %v269, 0.0
    %v274 = vsub.f32 %v272, %v62
    %v275 = vsub.f32 %v273, %v63
    %v276 = vmul.f32 %v188, %v274
    %v277 = vmul.f32 %v190, %v275
    %v278 = vadd.f32 %v62, %v276
    %v279 = vadd.f32 %v63, %v277
    %280 = vmatprep.subr.mxu0 0.0
    %281 = vmatpush1.msra.mxu0 %v64
    %282 = vmatprep.subr.mxu0 0.0
    %283 = vmatpush1.msra.mxu0 %v65
    %284 = vmatprep.subr.mxu0 0.0
    %285 = vmatpush1.msra.mxu0 %v66
    %286 = vmatprep.subr.mxu0 0.0
    %287 = vmatpush1.msra.mxu0 %v67
    %288 = vmatprep.subr.mxu0 0.0
    %289 = vmatpush1.msra.mxu0 %v68
    %290 = vmatprep.subr.mxu0 0.0
    %291 = vmatpush1.msra.mxu0 %v69
    %292 = vmatprep.subr.mxu0 0.0
    %293 = vmatpush1.msra.mxu0 %v70
    %294 = vmatprep.subr.mxu0 0.0
    %295 = vmatpush1.msra.mxu0 %v71
    %296 = vmatprep.subr.mxu0 0.0
    %297 = vmatpush1.msra.mxu0 %v72
    %298 = vmatprep.subr.mxu0 0.0
    %299 = vmatpush1.msra.mxu0 %v73
    %300 = vmatprep.subr.mxu0 0.0
    %301 = vmatpush1.msra.mxu0 %v74
    %302 = vmatprep.subr.mxu0 0.0
    %303 = vmatpush1.msra.mxu0 %v75
    %304 = vmatprep.subr.mxu0 0.0
    %305 = vmatpush1.msra.mxu0 %v76
    %306 = vmatprep.subr.mxu0 0.0
    %307 = vmatpush1.msra.mxu0 %v77
    %308 = vmatprep.subr.mxu0 0.0
    %309 = vmatpush1.msra.mxu0 %v78
    %310 = vmatprep.subr.mxu0 0.0
    %311 = vmatpush1.msra.mxu0 %v79
    %312 = vmatprep.subr.mxu0 0.0
    %313 = vmatpush1.msra.mxu0 0.0
    %314 = vmatprep.subr.mxu0 0.0
    %315 = vmatpush1.msra.mxu0 0.0
    %316 = vmatprep.subr.mxu0 0.0
    %317 = vmatpush1.msra.mxu0 0.0
    %318 = vmatprep.subr.mxu0 0.0
    %319 = vmatpush1.msra.mxu0 0.0
    %320 = vmatprep.subr.mxu0 0.0
    %321 = vmatpush1.msra.mxu0 0.0
    %322 = vmatprep.subr.mxu0 0.0
    %323 = vmatpush1.msra.mxu0 0.0
    %324 = vmatprep.subr.mxu0 0.0
    %325 = vmatpush1.msra.mxu0 0.0
    %326 = vmatprep.subr.mxu0 0.0
    %327 = vmatpush1.msra.mxu0 0.0
    %328 = vmatprep.subr.mxu0 0.0
    %329 = vmatpush1.msra.mxu0 0.0
    %330 = vmatprep.subr.mxu0 0.0
    %331 = vmatpush1.msra.mxu0 0.0
    %332 = vmatprep.subr.mxu0 0.0
    %333 = vmatpush1.msra.mxu0 0.0
    %334 = vmatprep.subr.mxu0 0.0
    %335 = vmatpush1.msra.mxu0 0.0
    %336 = vmatprep.subr.mxu0 0.0
    %337 = vmatpush1.msra.mxu0 0.0
    %338 = vmatprep.subr.mxu0 0.0
    %339 = vmatpush1.msra.mxu0 0.0
    %340 = vmatprep.subr.mxu0 0.0
    %341 = vmatpush1.msra.mxu0 0.0
    %342 = vmatprep.subr.mxu0 0.0
    %343 = vmatpush1.msra.mxu0 0.0
    %344 = vmatprep.mubr.f32.mxu0 0.0
    %345 = vmatmul.mubr.f32.gmra.mrb[0].mxu0 %v278
    %v346 = vpop.f32.mrb[0].mxu0
    %v347 = vadd.f32 %v102, %v346
    %v348 = vpop.f32.mrb[0].mxu0
    %349 = vmatprep.mubr.f32.mxu0 0.0
    %350 = vmatmul.mubr.f32.gmra.mrb[0].mxu0 %v279
    %v351 = vpop.f32.mrb[0].mxu0
    %v352 = vadd.f32 %v102, %v351
    %v353 = vpop.f32.mrb[0].mxu0
    %354 = vdwg.mxu0
    %v355 = vsub.f32 0.0, %v347
    %v356 = vsub.f32 0.0, %v352
    %v357 = vmul.f32 %v355, 1.442695
    %v358 = vpow.pop %v357
    %v359 = vmul.f32 %v356, 1.442695
    %v360 = vpow.pop %v359
    %v361 = vadd.f32 %v358, 1.0
    %v362 = vadd.f32 %v360, 1.0
    %v363 = vrcp.pop %v361
    %v364 = vmul.f32 1.0, %v363
    %v365 = vrcp.pop %v362
    %v366 = vmul.f32 1.0, %v365
    %367 = vmatprep.subr.mxu0 0.0
    %368 = vmatpush1.msra.mxu0 %v81
    %369 = vmatprep.subr.mxu0 0.0
    %370 = vmatpush1.msra.mxu0 %v82
    %371 = vmatprep.subr.mxu0 0.0
    %372 = vmatpush1.msra.mxu0 %v83
    %373 = vmatprep.subr.mxu0 0.0
    %374 = vmatpush1.msra.mxu0 %v84
    %375 = vmatprep.subr.mxu0 0.0
    %376 = vmatpush1.msra.mxu0 %v85
    %377 = vmatprep.subr.mxu0 0.0
    %378 = vmatpush1.msra.mxu0 %v86
    %379 = vmatprep.subr.mxu0 0.0
    %380 = vmatpush1.msra.mxu0 %v87
    %381 = vmatprep.subr.mxu0 0.0
    %382 = vmatpush1.msra.mxu0 %v88
    %383 = vmatprep.subr.mxu0 0.0
    %384 = vmatpush1.msra.mxu0 %v89
    %385 = vmatprep.subr.mxu0 0.0
    %386 = vmatpush1.msra.mxu0 %v90
    %387 = vmatprep.subr.mxu0 0.0
    %388 = vmatpush1.msra.mxu0 %v91
    %389 = vmatprep.subr.mxu0 0.0
    %390 = vmatpush1.msra.mxu0 %v92
    %391 = vmatprep.subr.mxu0 0.0
    %392 = vmatpush1.msra.mxu0 %v93
    %393 = vmatprep.subr.mxu0 0.0
    %394 = vmatpush1.msra.mxu0 %v94
    %395 = vmatprep.subr.mxu0 0.0
    %396 = vmatpush1.msra.mxu0 %v95
    %397 = vmatprep.subr.mxu0 0.0
    %398 = vmatpush1.msra.mxu0 %v96
    %399 = vmatprep.subr.mxu0 0.0
    %400 = vmatpush1.msra.mxu0 0.0
    %401 = vmatprep.subr.mxu0 0.0
    %402 = vmatpush1.msra.mxu0 0.0
    %403 = vmatprep.subr.mxu0 0.0
    %404 = vmatpush1.msra.mxu0 0.0
    %405 = vmatprep.subr.mxu0 0.0
    %406 = vmatpush1.msra.mxu0 0.0
    %407 = vmatprep.subr.mxu0 0.0
    %408 = vmatpush1.msra.mxu0 0.0
    %409 = vmatprep.subr.mxu0 0.0
    %410 = vmatpush1.msra.mxu0 0.0
    %411 = vmatprep.subr.mxu0 0.0
    %412 = vmatpush1.msra.mxu0 0.0
    %413 = vmatprep.subr.mxu0 0.0
    %414 = vmatpush1.msra.mxu0 0.0
    %415 = vmatprep.subr.mxu0 0.0
    %416 = vmatpush1.msra.mxu0 0.0
    %417 = vmatprep.subr.mxu0 0.0
    %418 = vmatpush1.msra.mxu0 0.0
    %419 = vmatprep.subr.mxu0 0.0
    %420 = vmatpush1.msra.mxu0 0.0
    %421 = vmatprep.subr.mxu0 0.0
    %422 = vmatpush1.msra.mxu0 0.0
    %423 = vmatprep.subr.mxu0 0.0
    %424 = vmatpush1.msra.mxu0 0.0
    %425 = vmatprep.subr.mxu0 0.0
    %426 = vmatpush1.msra.mxu0 0.0
    %427 = vmatprep.subr.mxu0 0.0
    %428 = vmatpush1.msra.mxu0 0.0
    %429 = vmatprep.subr.mxu0 0.0
    %430 = vmatpush1.msra.mxu0 0.0
    %431 = vmatprep.mubr.f32.mxu0 0.0
    %432 = vmatmul.mubr.f32.gmra.mrb[0].mxu0 %v278
    %v433 = vpop.f32.mrb[0].mxu0
    %v434 = vadd.f32 %v195, %v433
    %v435 = vpop.f32.mrb[0].mxu0
    %436 = vmatprep.mubr.f32.mxu0 0.0
    %437 = vmatmul.mubr.f32.gmra.mrb[0].mxu0 %v279
    %v438 = vpop.f32.mrb[0].mxu0
    %v439 = vadd.f32 %v195, %v438
    %v440 = vpop.f32.mrb[0].mxu0
    %441 = vdwg.mxu0
    %v442 = vmax.f32 %v434, 0.0
    %v443 = vmax.f32 %v439, 0.0
    %v444 = vsub.f32 %v442, %v278
    %v445 = vsub.f32 %v443, %v279
    %v446 = vmul.f32 %v364, %v444
    %v447 = vmul.f32 %v366, %v445
    %v448 = vadd.f32 %v278, %v446
    %v449 = vadd.f32 %v279, %v447
    %450 = vmatprep.subr.mxu0 0.0
    %451 = vmatpush1.msra.mxu0 %v64
    %452 = vmatprep.subr.mxu0 0.0
    %453 = vmatpush1.msra.mxu0 %v65
    %454 = vmatprep.subr.mxu0 0.0
    %455 = vmatpush1.msra.mxu0 %v66
    %456 = vmatprep.subr.mxu0 0.0
    %457 = vmatpush1.msra.mxu0 %v67
    %458 = vmatprep.subr.mxu0 0.0
    %459 = vmatpush1.msra.mxu0 %v68
    %460 = vmatprep.subr.mxu0 0.0
    %461 = vmatpush1.msra.mxu0 %v69
    %462 = vmatprep.subr.mxu0 0.0
    %463 = vmatpush1.msra.mxu0 %v70
    %464 = vmatprep.subr.mxu0 0.0
    %465 = vmatpush1.msra.mxu0 %v71
    %466 = vmatprep.subr.mxu0 0.0
    %467 = vmatpush1.msra.mxu0 %v72
    %468 = vmatprep.subr.mxu0 0.0
    %469 = vmatpush1.msra.mxu0 %v73
    %470 = vmatprep.subr.mxu0 0.0
    %471 = vmatpush1.msra.mxu0 %v74
    %472 = vmatprep.subr.mxu0 0.0
    %473 = vmatpush1.msra.mxu0 %v75
    %474 = vmatprep.subr.mxu0 0.0
    %475 = vmatpush1.msra.mxu0 %v76
    %476 = vmatprep.subr.mxu0 0.0
    %477 = vmatpush1.msra.mxu0 %v77
    %478 = vmatprep.subr.mxu0 0.0
    %479 = vmatpush1.msra.mxu0 %v78
    %480 = vmatprep.subr.mxu0 0.0
    %481 = vmatpush1.msra.mxu0 %v79
    %482 = vmatprep.subr.mxu0 0.0
    %483 = vmatpush1.msra.mxu0 0.0
    %484 = vmatprep.subr.mxu0 0.0
    %485 = vmatpush1.msra.mxu0 0.0
    %486 = vmatprep.subr.mxu0 0.0
    %487 = vmatpush1.msra.mxu0 0.0
    %488 = vmatprep.subr.mxu0 0.0
    %489 = vmatpush1.msra.mxu0 0.0
    %490 = vmatprep.subr.mxu0 0.0
    %491 = vmatpush1.msra.mxu0 0.0
    %492 = vmatprep.subr.mxu0 0.0
    %493 = vmatpush1.msra.mxu0 0.0
    %494 = vmatprep.subr.mxu0 0.0
    %495 = vmatpush1.msra.mxu0 0.0
    %496 = vmatprep.subr.mxu0 0.0
    %497 = vmatpush1.msra.mxu0 0.0
    %498 = vmatprep.subr.mxu0 0.0
    %499 = vmatpush1.msra.mxu0 0.0
    %500 = vmatprep.subr.mxu0 0.0
    %501 = vmatpush1.msra.mxu0 0.0
    %502 = vmatprep.subr.mxu0 0.0
    %503 = vmatpush1.msra.mxu0 0.0
    %504 = vmatprep.subr.mxu0 0.0
    %505 = vmatpush1.msra.mxu0 0.0
    %506 = vmatprep.subr.mxu0 0.0
    %507 = vmatpush1.msra.mxu0 0.0
    %508 = vmatprep.subr.mxu0 0.0
    %509 = vmatpush1.msra.mxu0 0.0
    %510 = vmatprep.subr.mxu0 0.0
    %511 = vmatpush1.msra.mxu0 0.0
    %512 = vmatprep.subr.mxu0 0.0
    %513 = vmatpush1.msra.mxu0 0.0
    %514 = vmatprep.mubr.f32.mxu0 0.0
    %515 = vmatmul.mubr.f32.gmra.mrb[0].mxu0 %v448
    %v516 = vpop.f32.mrb[0].mxu0
    %v517 = vadd.f32 %v102, %v516
    %v518 = vpop.f32.mrb[0].mxu0
    %519 = vmatprep.mubr.f32.mxu0 0.0
    %520 = vmatmul.mubr.f32.gmra.mrb[0].mxu0 %v449
    %v521 = vpop.f32.mrb[0].mxu0
    %v522 = vadd.f32 %v102, %v521
    %v523 = vpop.f32.mrb[0].mxu0
    %524 = vdwg.mxu0
    %v525 = vsub.f32 0.0, %v517
    %v526 = vsub.f32 0.0, %v522
    %v527 = vmul.f32 %v525, 1.442695
    %v528 = vpow.pop %v527
    %v529 = vmul.f32 %v526, 1.442695
    %v530 = vpow.pop %v529
    %v531 = vadd.f32 %v528, 1.0
    %v532 = vadd.f32 %v530, 1.0
    %v533 = vrcp.pop %v531
    %v534 = vmul.f32 1.0, %v533
    %v535 = vrcp.pop %v532
    %v536 = vmul.f32 1.0, %v535
    %537 = vmatprep.subr.mxu0 0.0
    %538 = vmatpush1.msra.mxu0 %v81
    %539 = vmatprep.subr.mxu0 0.0
    %540 = vmatpush1.msra.mxu0 %v82
    %541 = vmatprep.subr.mxu0 0.0
    %542 = vmatpush1.msra.mxu0 %v83
    %543 = vmatprep.subr.mxu0 0.0
    %544 = vmatpush1.msra.mxu0 %v84
    %545 = vmatprep.subr.mxu0 0.0
    %546 = vmatpush1.msra.mxu0 %v85
    %547 = vmatprep.subr.mxu0 0.0
    %548 = vmatpush1.msra.mxu0 %v86
    %549 = vmatprep.subr.mxu0 0.0
    %550 = vmatpush1.msra.mxu0 %v87
    %551 = vmatprep.subr.mxu0 0.0
    %552 = vmatpush1.msra.mxu0 %v88
    %553 = vmatprep.subr.mxu0 0.0
    %554 = vmatpush1.msra.mxu0 %v89
    %555 = vmatprep.subr.mxu0 0.0
    %556 = vmatpush1.msra.mxu0 %v90
    %557 = vmatprep.subr.mxu0 0.0
    %558 = vmatpush1.msra.mxu0 %v91
    %559 = vmatprep.subr.mxu0 0.0
    %560 = vmatpush1.msra.mxu0 %v92
    %561 = vmatprep.subr.mxu0 0.0
    %562 = vmatpush1.msra.mxu0 %v93
    %563 = vmatprep.subr.mxu0 0.0
    %564 = vmatpush1.msra.mxu0 %v94
    %565 = vmatprep.subr.mxu0 0.0
    %566 = vmatpush1.msra.mxu0 %v95
    %567 = vmatprep.subr.mxu0 0.0
    %568 = vmatpush1.msra.mxu0 %v96
    %569 = vmatprep.subr.mxu0 0.0
    %570 = vmatpush1.msra.mxu0 0.0
    %571 = vmatprep.subr.mxu0 0.0
    %572 = vmatpush1.msra.mxu0 0.0
    %573 = vmatprep.subr.mxu0 0.0
    %574 = vmatpush1.msra.mxu0 0.0
    %575 = vmatprep.subr.mxu0 0.0
    %576 = vmatpush1.msra.mxu0 0.0
    %577 = vmatprep.subr.mxu0 0.0
    %578 = vmatpush1.msra.mxu0 0.0
    %579 = vmatprep.subr.mxu0 0.0
    %580 = vmatpush1.msra.mxu0 0.0
    %581 = vmatprep.subr.mxu0 0.0
    %582 = vmatpush1.msra.mxu0 0.0
    %583 = vmatprep.subr.mxu0 0.0
    %584 = vmatpush1.msra.mxu0 0.0
    %585 = vmatprep.subr.mxu0 0.0
    %586 = vmatpush1.msra.mxu0 0.0
    %587 = vmatprep.subr.mxu0 0.0
    %588 = vmatpush1.msra.mxu0 0.0
    %589 = vmatprep.subr.mxu0 0.0
    %590 = vmatpush1.msra.mxu0 0.0
    %591 = vmatprep.subr.mxu0 0.0
    %592 = vmatpush1.msra.mxu0 0.0
    %593 = vmatprep.subr.mxu0 0.0
    %594 = vmatpush1.msra.mxu0 0.0
    %595 = vmatprep.subr.mxu0 0.0
    %596 = vmatpush1.msra.mxu0 0.0
    %597 = vmatprep.subr.mxu0 0.0
    %598 = vmatpush1.msra.mxu0 0.0
    %599 = vmatprep.subr.mxu0 0.0
    %600 = vmatpush1.msra.mxu0 0.0
    %601 = vmatprep.mubr.f32.mxu0 0.0
    %602 = vmatmul.mubr.f32.gmra.mrb[0].mxu0 %v448
    %v603 = vpop.f32.mrb[0].mxu0
    %v604 = vadd.f32 %v195, %v603
    %v605 = vpop.f32.mrb[0].mxu0
    %606 = vmatprep.mubr.f32.mxu0 0.0
    %607 = vmatmul.mubr.f32.gmra.mrb[0].mxu0 %v449
    %v608 = vpop.f32.mrb[0].mxu0
    %v609 = vadd.f32 %v195, %v608
    %v610 = vpop.f32.mrb[0].mxu0
    %611 = vdwg.mxu0
    %v612 = vmax.f32 %v604, 0.0
    %v613 = vmax.f32 %v609, 0.0
    %v614 = vsub.f32 %v612, %v448
    %v615 = vsub.f32 %v613, %v449
    %v616 = vmul.f32 %v534, %v614
    %v617 = vmul.f32 %v536, %v615
    %v618 = vadd.f32 %v448, %v616
    %v619 = vadd.f32 %v449, %v617
    %620 = vst [vmem:[#allocation8] sm:$0xff] %v618
    %621 = vst [vmem:[#allocation8 + $0x8] sm:$0xff] %v619
    // Predicated region
    $region34: #{tpu_custom_call.1} parent=1 // pred_check
      _
    $region35: #{tpu_custom_call.1} parent=1 // pred_check_branch
      %623 = sbr.rel (0) target = $region37
    $region36: #{tpu_custom_call.1} parent=1 // pred_region
      %s625 = ssub.s32 256, 256
      %626 = vsyncadd [#allocation4], %s625
      %s627 = sshll.u32 [#allocation8], 4
      %s628 = int_to_ptr.vmem [resolvable:$true] %s627
      %633 = dma.vmem_to_hbm [thread:$0]  %s628, 256, %s5, [#allocation4], 128, 128, 8
    $region37: #{tpu_custom_call.1} parent=1 // pred_fallthru
      _
    // Predicated region
    $region38: #{tpu_custom_call.1} parent=1 // pred_check
      _
    $region39: #{tpu_custom_call.1} parent=1 // pred_check_branch
      %635 = sbr.rel (0) target = $region41
    $region40: #{tpu_custom_call.1} parent=1 // pred_region
      %636 = dma.done [#allocation4], 256
    $region41: #{tpu_custom_call.1} parent=1 // pred_fallthru
      _
    %637 = vsyncpa [#allocation3], 1
    %638 = vsyncpa [#allocation6], 1
    %639 = vsyncpa [#allocation4], 1

</llo_original>
